<compile_context>
chip_gen: v6e
topology: v6e:2x2x1
jax: 0.10.0
libtpu: 0.0.40
codegen_flags: <defaults>
</compile_context>

<pallas_src>
import functools

import numpy as np
import jax
import jax.numpy as jnp
from jax.experimental import pallas as pl
from jax.experimental.pallas import tpu as pltpu


_LANES = 128  # one full vreg lane row; fused row [FE | FL | sum(FE^2)] padded to this


def _fm_gather_kernel(off_ref, idx_ref, row_ref, bias_ref, out_ref, acc_ref,
                      *, embedding_dim, output_dim):
    """Grid step (b, f): accumulate one gathered fused row; finalize at f == F-1.

    off_ref/idx_ref : SMEM scalar-prefetch (used only by the index_maps)
    row_ref  : (1, LANES) gathered table row  [FE | FL | sum_e FE^2 | 0 pad]
    bias_ref : (1, LANES)                     [0.. | FL_bias       | 0 pad]
    out_ref  : (1, LANES) lane-dense output row for sample b
    acc_ref  : (1, LANES) f32 VMEM accumulator, persists across the f axis
    """
    del off_ref, idx_ref
    E, O = embedding_dim, output_dim
    lanes = row_ref.shape[-1]
    f = pl.program_id(1)

    @pl.when(f == 0)
    def _():
        acc_ref[...] = jnp.zeros_like(acc_ref)

    # Everything we need is a linear sum over fields: FE-sum, FL-sum and the
    # precomputed per-row sum(FE^2) all accumulate in one vector add.
    acc_ref[...] += row_ref[...]

    @pl.when(f == pl.num_programs(1) - 1)
    def _():
        acc = acc_ref[...]                                        # (1, LANES) f32
        lane = jax.lax.broadcasted_iota(jnp.int32, (1, lanes), 1)
        # sum_e (sum_f FE)^2 : cross-lane reduce over the FE lanes only (XLU).
        s_sq = jnp.sum(jnp.where(lane < E, acc * acc, 0.0))
        # sum_f sum_e FE^2 was precomputed per table row (lane E+O).
        sq_sum = jnp.sum(jnp.where(lane == E + O, acc, 0.0))
        y_sum = 0.5 * (s_sq - sq_sum)                             # scalar
        # Epilogue stays in f32 (no bf16 VPU/EUP on v5e).
        z_full = acc + bias_ref[...] + y_sum                      # lanes [E, E+O) hold z
        out_mask = (lane >= E) & (lane < E + O)
        # Full-width unmasked (1, 128) store; wrapper slices the valid lanes.
        out_ref[...] = jnp.where(out_mask, jax.nn.sigmoid(z_full), 0.0)


def fm_prepare_table(fl_weight, fl_bias, fe_weight, lanes=_LANES):
    """Build the fused gather table ONCE (hoisted out of the per-call path).

    Row v = [ FE[v] (E) | FL[v] (O) | sum_e FE[v]^2 (1) | zero pad to `lanes` ].
    Returned as (V_pad, 1, lanes) so a (None, 1, lanes) BlockSpec keeps the last
    two dims equal to the full array dims ((8,128) rule), plus a (1, lanes)
    zero-padded bias row.
    """
    V, O = fl_weight.shape
    _, E = fe_weight.shape
    assert E + O + 1 <= lanes, "fused row must fit in one 128-lane slab"
    fl_weight = fl_weight.astype(jnp.float32)
    fe_weight = fe_weight.astype(jnp.float32)
    sqsum = jnp.sum(fe_weight * fe_weight, axis=1, keepdims=True)      # (V, 1)
    table = jnp.concatenate([fe_weight, fl_weight, sqsum], axis=1)     # (V, E+O+1)
    v_pad = (-V) % 8
    table = jnp.pad(table, ((0, v_pad), (0, lanes - (E + O + 1))))
    table = table.reshape(V + v_pad, 1, lanes)
    bias_row = jnp.zeros((1, lanes), jnp.float32)
    bias_row = bias_row.at[0, E:E + O].set(fl_bias.astype(jnp.float32))
    return table, bias_row


@functools.partial(jax.jit, static_argnames=("embedding_dim", "output_dim"))
def fm_forward(x_idx, offsets, table, bias_row, *, embedding_dim, output_dim):
    """x_idx: (B, F) int32 raw field indices. table/bias_row from fm_prepare_table."""
    B, F = x_idx.shape
    E, O = embedding_dim, output_dim
    lanes = table.shape[-1]

    kernel = functools.partial(_fm_gather_kernel,
                               embedding_dim=E, output_dim=O)

    # Offsets add folded into the scalar index_map (SMEM scalar arithmetic):
    # gathered row = x_idx[b, f] + offsets[f].
    # NOTE: indices are assumed in-range; at scale add a wrapper-side clamp or
    # pl.debug_check before changing field_dims/offsets.
    def row_index_map(b, f, off_ref, idx_ref):
        return (idx_ref[b * F + f] + off_ref[f], 0, 0)

    def bias_index_map(b, f, off_ref, idx_ref):
        return (0, 0)

    def out_index_map(b, f, off_ref, idx_ref):
        return (b, 0, 0)

    out = pl.pallas_call(
        kernel,
        out_shape=jax.ShapeDtypeStruct((B, 1, lanes), jnp.float32),
        grid_spec=pltpu.PrefetchScalarGridSpec(
            num_scalar_prefetch=2,
            grid=(B, F),
            in_specs=[
                # One gathered fused row per (b, f) step (data-dependent index).
                pl.BlockSpec((None, 1, lanes), row_index_map),
                # Resident padded bias row.
                pl.BlockSpec((1, lanes), bias_index_map),
            ],
            out_specs=pl.BlockSpec((None, 1, lanes), out_index_map),
            scratch_shapes=[pltpu.VMEM((1, lanes), jnp.float32)],
        ),
        compiler_params=pltpu.CompilerParams(
            dimension_semantics=("parallel", "arbitrary")),
    )(jnp.asarray(offsets, jnp.int32).reshape(-1),
      x_idx.astype(jnp.int32).reshape(-1),
      table, bias_row)

    result = out[:, 0, E:E + O]            # (B, O)
    if O == 1:
        result = result[:, 0]              # torch: z.squeeze(1)
    return result


def fm_reference(x_idx, offsets, fl_weight, fl_bias, fe_weight):
    """Pure-JAX reference mirroring the PyTorch forward."""
    idx = x_idx + jnp.asarray(offsets, jnp.int32)[None, :]
    x0 = fl_weight[idx].sum(axis=1) + fl_bias                        # (B, O)
    x1 = fe_weight[idx]                                              # (B, F, E)
    y = 0.5 * (jnp.sum(x1, axis=1) ** 2 - jnp.sum(x1 ** 2, axis=1))  # (B, E)
    z = x0 + jnp.sum(y, axis=1, keepdims=True)                       # (B, O)
    out = jax.nn.sigmoid(z)
    return out[:, 0] if z.shape[1] == 1 else out


if __name__ == "__main__":
    # Small hyper-params consistent with the module's __init__.
    field_dims = [10, 10, 10, 10]
    output_dim = 1
    embedding_dim = 32
    B, F = 8, len(field_dims)
    V = int(sum(field_dims))

    # Reproduce the module's (odd) offsets construction exactly.
    offsets = np.array((0, *np.cumsum(field_dims[:-1])), dtype=int)
    offsets[-1] = offsets[-3]
    offsets[-2] = offsets[-3]

    key = jax.random.PRNGKey(0)
    k_fl, k_fe, k_x = jax.random.split(key, 3)

    # nn.Embedding default init: N(0, 1).
    fl_weight = jax.random.normal(k_fl, (V, output_dim), dtype=jnp.float32)
    fl_bias = jnp.zeros((output_dim,), dtype=jnp.float32)
    # xavier_uniform_ for FE: U(-a, a), a = sqrt(6 / (V + E)).
    bound = float(np.sqrt(6.0 / (V + embedding_dim)))
    fe_weight = jax.random.uniform(
        k_fe, (V, embedding_dim), dtype=jnp.float32, minval=-bound, maxval=bound)
    # TODO(synk): self.fc (nn.Linear) is declared in __init__ but never used in
    # forward(); intentionally omitted.

    x = jax.random.randint(k_x, (B, F), 0, min(field_dims), dtype=jnp.int32)

    # Table is built ONCE (hoisted), then reused for every forward call.
    table, bias_row = fm_prepare_table(fl_weight, fl_bias, fe_weight)
    table = jax.block_until_ready(table)

    out = jax.block_until_ready(
        fm_forward(x, offsets, table, bias_row,
                   embedding_dim=embedding_dim, output_dim=output_dim))
    ref = jax.block_until_ready(
        fm_reference(x, offsets, fl_weight, fl_bias, fe_weight))

    assert out.shape == (B,), out.shape
    np.testing.assert_allclose(np.asarray(out), np.asarray(ref), rtol=1e-5, atol=1e-5)
    print("KERNEL_OK")
</pallas_src>

<mosaic_0001>
module attributes {stable_mosaic.version = 11 : i64} {
  func.func @_fm_gather_kernel(%arg0: i32, %arg1: i32, %arg2: memref<4xi32, #tpu.memory_space<smem>>, %arg3: memref<32xi32, #tpu.memory_space<smem>>, %arg4: memref<1x1x128xf32, #tpu.memory_space<vmem>>, %arg5: memref<1x128xf32, #tpu.memory_space<vmem>>, %arg6: memref<1x1x128xf32, #tpu.memory_space<vmem>>, %arg7: memref<1x128xf32, #tpu.memory_space<vmem>>) attributes {dimension_semantics = [#tpu.dimension_semantics<parallel>, #tpu.dimension_semantics<arbitrary>], iteration_bounds = array<i64: 8, 4>, scalar_prefetch = 2 : i64, scratch_operands = 1 : i64, tpu.core_type = #tpu.core_type<tc>, window_params = [{transform_indices = @transform_0, window_bounds = array<i64: 1, 1, 128>}, {pipeline_mode = #tpu.pipeline_mode<synchronous>, transform_indices = @transform_1, window_bounds = array<i64: 1, 128>}, {transform_indices = @transform_2, window_bounds = array<i64: 1, 1, 128>}]} {
    %c0_i32 = arith.constant 0 : i32
    %0 = arith.cmpi eq, %arg1, %c0_i32 : i32
    %1 = arith.extui %0 : i1 to i32
    %c0_i32_0 = arith.constant 0 : i32
    %2 = arith.cmpi ne, %1, %c0_i32_0 : i32
    scf.if %2 {
      %cst = arith.constant 0.000000e+00 : f32
      %11 = vector.broadcast %cst : f32 to vector<1x128xf32>
      %c0_8 = arith.constant 0 : index
      %c0_9 = arith.constant 0 : index
      %12 = vector.load %arg7[%c0_8, %c0_9] : memref<1x128xf32, #tpu.memory_space<vmem>>, vector<1x128xf32>
      tpu.vector_store %arg7[%c0_8, %c0_9], %11 {strides = array<i32>} : memref<1x128xf32, #tpu.memory_space<vmem>>, vector<1x128xf32>,
    } else {
    }
    %c0 = arith.constant 0 : index
    %c0_1 = arith.constant 0 : index
    %3 = vector.load %arg7[%c0, %c0_1] : memref<1x128xf32, #tpu.memory_space<vmem>>, vector<1x128xf32>
    %c0_2 = arith.constant 0 : index
    %c0_3 = arith.constant 0 : index
    %c0_4 = arith.constant 0 : index
    %4 = vector.load %arg4[%c0_2, %c0_3, %c0_4] : memref<1x1x128xf32, #tpu.memory_space<vmem>>, vector<1x1x128xf32>
    %5 = vector.shape_cast %4 : vector<1x1x128xf32> to vector<1x128xf32>
    %6 = arith.addf %3, %5 : vector<1x128xf32>
    %c0_5 = arith.constant 0 : index
    %c0_6 = arith.constant 0 : index
    %7 = vector.load %arg7[%c0_5, %c0_6] : memref<1x128xf32, #tpu.memory_space<vmem>>, vector<1x128xf32>
    tpu.vector_store %arg7[%c0_5, %c0_6], %6 {strides = array<i32>} : memref<1x128xf32, #tpu.memory_space<vmem>>, vector<1x128xf32>,
    %c3_i32 = arith.constant 3 : i32
    %8 = arith.cmpi eq, %arg1, %c3_i32 : i32
    %9 = arith.extui %8 : i1 to i32
    %c0_i32_7 = arith.constant 0 : i32
    %10 = arith.cmpi ne, %9, %c0_i32_7 : i32
    scf.if %10 {
      %c0_8 = arith.constant 0 : index
      %c0_9 = arith.constant 0 : index
      %11 = vector.load %arg7[%c0_8, %c0_9] : memref<1x128xf32, #tpu.memory_space<vmem>>, vector<1x128xf32>
      %12 = tpu.iota {dimensions = array<i32: 1>} : vector<1x128xi32>
      %c32_i32 = arith.constant 32 : i32
      %13 = vector.broadcast %c32_i32 : i32 to vector<1x128xi32>
      %14 = arith.cmpi slt, %12, %13 : vector<1x128xi32>
      %15 = arith.mulf %11, %11 : vector<1x128xf32>
      %cst = arith.constant 0.000000e+00 : f32
      %16 = vector.broadcast %cst : f32 to vector<1x128xf32>
      %17 = arith.select %14, %15, %16 : vector<1x128xi1>, vector<1x128xf32>
      %18 = vector.shape_cast %17 : vector<1x128xf32> to vector<1x1x128xf32>
      %cst_10 = arith.constant dense<0.000000e+00> : vector<1xf32>
      %19 = vector.multi_reduction <add>, %18, %cst_10 [1, 2] : vector<1x1x128xf32> to vector<1xf32>
      %20 = vector.shape_cast %19 : vector<1xf32> to vector<1x1x1xf32>
      %21 = vector.extract %20[0, 0, 0] : f32 from vector<1x1x1xf32>
      %c33_i32 = arith.constant 33 : i32
      %22 = vector.broadcast %c33_i32 : i32 to vector<1x128xi32>
      %23 = arith.cmpi eq, %12, %22 : vector<1x128xi32>
      %cst_11 = arith.constant 0.000000e+00 : f32
      %24 = vector.broadcast %cst_11 : f32 to vector<1x128xf32>
      %25 = arith.select %23, %11, %24 : vector<1x128xi1>, vector<1x128xf32>
      %26 = vector.shape_cast %25 : vector<1x128xf32> to vector<1x1x128xf32>
      %cst_12 = arith.constant dense<0.000000e+00> : vector<1xf32>
      %27 = vector.multi_reduction <add>, %26, %cst_12 [1, 2] : vector<1x1x128xf32> to vector<1xf32>
      %28 = vector.shape_cast %27 : vector<1xf32> to vector<1x1x1xf32>
      %29 = vector.extract %28[0, 0, 0] : f32 from vector<1x1x1xf32>
      %30 = arith.subf %21, %29 : f32
      %cst_13 = arith.constant 5.000000e-01 : f32
      %31 = arith.mulf %cst_13, %30 : f32
      %c0_14 = arith.constant 0 : index
      %c0_15 = arith.constant 0 : index
      %32 = vector.load %arg5[%c0_14, %c0_15] : memref<1x128xf32, #tpu.memory_space<vmem>>, vector<1x128xf32>
      %33 = arith.addf %11, %32 : vector<1x128xf32>
      %34 = vector.broadcast %31 : f32 to vector<1x128xf32>
      %35 = arith.addf %33, %34 : vector<1x128xf32>
      %c32_i32_16 = arith.constant 32 : i32
      %36 = vector.broadcast %c32_i32_16 : i32 to vector<1x128xi32>
      %37 = arith.cmpi sge, %12, %36 : vector<1x128xi32>
      %c33_i32_17 = arith.constant 33 : i32
      %38 = vector.broadcast %c33_i32_17 : i32 to vector<1x128xi32>
      %39 = arith.cmpi slt, %12, %38 : vector<1x128xi32>
      %40 = arith.andi %37, %39 : vector<1x128xi1>
      %41 = arith.negf %35 : vector<1x128xf32>
      %42 = math.exp %41 : vector<1x128xf32>
      %cst_18 = arith.constant 1.000000e+00 : f32
      %43 = vector.broadcast %cst_18 : f32 to vector<1x128xf32>
      %44 = arith.addf %43, %42 : vector<1x128xf32>
      %45 = arith.divf %43, %44 : vector<1x128xf32>
      %cst_19 = arith.constant 0.000000e+00 : f32
      %46 = vector.broadcast %cst_19 : f32 to vector<1x128xf32>
      %47 = arith.select %40, %45, %46 : vector<1x128xi1>, vector<1x128xf32>
      %c0_20 = arith.constant 0 : index
      %c0_21 = arith.constant 0 : index
      %c0_22 = arith.constant 0 : index
      %48 = vector.load %arg6[%c0_20, %c0_21, %c0_22] : memref<1x1x128xf32, #tpu.memory_space<vmem>>, vector<1x1x128xf32>
      %49 = vector.shape_cast %48 : vector<1x1x128xf32> to vector<1x128xf32>
      %50 = vector.shape_cast %47 : vector<1x128xf32> to vector<1x1x128xf32>
      tpu.vector_store %arg6[%c0_20, %c0_21, %c0_22], %50 {strides = array<i32>} : memref<1x1x128xf32, #tpu.memory_space<vmem>>, vector<1x1x128xf32>,
    } else {
    }
    return
  }
  func.func @transform_0(%arg0: i32, %arg1: i32, %arg2: memref<4xi32, #tpu.memory_space<smem>>, %arg3: memref<32xi32, #tpu.memory_space<smem>>) -> (i32, i32, i32) {
    %c4_i32 = arith.constant 4 : i32
    %0 = arith.muli %arg0, %c4_i32 : i32
    %1 = arith.addi %0, %arg1 : i32
    %2 = arith.index_cast %1 : i32 to index
    %3 = memref.load %arg3[%2] : memref<32xi32, #tpu.memory_space<smem>>
    %4 = arith.index_cast %arg1 : i32 to index
    %5 = memref.load %arg2[%4] : memref<4xi32, #tpu.memory_space<smem>>
    %6 = arith.addi %3, %5 : i32
    %c0_i32 = arith.constant 0 : i32
    %c0_i32_0 = arith.constant 0 : i32
    %c0_i32_1 = arith.constant 0 : i32
    return %6, %c0_i32, %c0_i32_0 : i32, i32, i32
  }
  func.func @transform_1(%arg0: i32, %arg1: i32, %arg2: memref<4xi32, #tpu.memory_space<smem>>, %arg3: memref<32xi32, #tpu.memory_space<smem>>) -> (i32, i32) {
    %c0_i32 = arith.constant 0 : i32
    %c0_i32_0 = arith.constant 0 : i32
    %c0_i32_1 = arith.constant 0 : i32
    return %c0_i32, %c0_i32_0 : i32, i32
  }
  func.func @transform_2(%arg0: i32, %arg1: i32, %arg2: memref<4xi32, #tpu.memory_space<smem>>, %arg3: memref<32xi32, #tpu.memory_space<smem>>) -> (i32, i32, i32) {
    %c0_i32 = arith.constant 0 : i32
    %c0_i32_0 = arith.constant 0 : i32
    %c0_i32_1 = arith.constant 0 : i32
    return %arg0, %c0_i32, %c0_i32_0 : i32, i32, i32
  }
}

</mosaic_0001>

<llo_original>
// kernel: fm_forward.1
$region0: #{fm_forward.1}
  #allocation0 [shape = 'u32[]', space=smem, size = 0x4, offset = 0x4, fixed_abs, tag = 'smem constant byte address 0x4 - core index']
  #allocation1 [shape = 'u32[144,128]{1,0:T(1,128)}', space=vmem, size = 0x12000, scoped, tag = 'internal scratch']
  #allocation2 [shape = 'f32[1,128]{1,0:T(1,128)}', space=vmem, size = 0x200, scoped, tag = 'scratch operand']
  #allocation3 [shape = 's32[1]{0}', space=sflag, size = 0x4, scoped, tag = 'scoped memory for fm_forward.1']
  #allocation4 [shape = 'u8[512]{0}', space=smem, size = 0x200, scoped, tag = 'prefetched SMEM operand 0']
  #allocation5 [shape = 'u8[512]{0}', space=smem, size = 0x200, scoped, tag = 'prefetched SMEM operand 1']
  %s0 = inlined_call_operand.vmem [shape: s32[4], index: 0, kind: input, shape index: {}]
  %s1 = inlined_call_operand.vmem [shape: s32[32], index: 1, kind: input, shape index: {}]
  %s2 = inlined_call_operand.hbm [shape: f32[40,1,128], index: 2, kind: input, shape index: {}]
  %s3 = inlined_call_operand.vmem [shape: f32[1,128], index: 3, kind: input, shape index: {}]
  %s4 = inlined_call_operand.vmem [shape: f32[8,1,128], index: 4, kind: output, shape index: {}]
  %s5 = sld [smem:[#allocation0]]
  $region53: #{fm_forward.1} parent=0
    _
  %s7 = ssub.s32 1, %s5
  %s8 = scalar_select 0, %s7, %s5
  %s9 = sshll.u32 %s0, 4
  %s10 = int_to_ptr.vmem [resolvable:$true] %s9
  %12 = dma.vmem_to_smem %s10, 16, [#allocation4], [#allocation3]
  %s13 = sshll.u32 %s1, 4
  %s14 = int_to_ptr.vmem [resolvable:$true] %s13
  %16 = dma.vmem_to_smem %s14, 16, [#allocation5], [#allocation3]
  %17 = dma.done [#allocation3], 32
  %18 = sfence
  $region1: #{fm_forward.1} parent=0
    #allocation6 [shape = 'u8[1024]{0}', space=vmem, size = 0x400, scoped, tag = 'input window, operand 2']
    #allocation7 [shape = 's32[2]{0}', space=sflag, size = 0x8, scoped, tag = 'scoped memory for fm_forward.1']
    %19 = vsyncpa [#allocation7], 0
    %s20 = scalar_lea.sflag [#allocation7], 1
    %21 = vsyncpa %s20, 0
    loop: start=0, step=1, limit=34
    $region2: #{fm_forward.1} parent=1 // loop_pre_header
      _
    $region3: #{fm_forward.1} parent=1 // loop_header
      %s23 = sphi 0, %s27
      %p24 = scmp.ge.s32.totalorder %s23, 34
      %s30 = sphi 0, %s42
      %s31 = sphi 0, %s38
      %s32 = sphi 0, %s30
      %s33 = sphi 0, %s31
      %s34 = sphi 0, %s32
      %s35 = sphi 0, %s33
      %s55 = sphi 0, %s57
      %s58 = sphi 0, %s55
      %s59 = sphi 0, %s58
      %s75 = sphi 0, %s59
      %s79 = sphi 0, %s79
      %s81 = sphi 0, %s79
      %s82 = sphi 0, %s81
      %s96 = sphi 0, %s82
      %s102 = sphi 0, %s104
      %s105 = sphi 0, %s102
      %s106 = sphi 0, %s105
      %s122 = sphi 0, %s106
    $region4: #{fm_forward.1} parent=1 // loop_header_branch
      %26 = sbr.rel (%p24) target = $region8
    $region5: #{fm_forward.1} parent=1 // loop_body
      %s28 = ssub.s32 %s23, 1
      %s29 = ssub.s32 %s23, 2
      %s36 = sadd.s32 1, %s31
      %p37 = scmp.ge.s32.totalorder %s36, 4
      %s38 = scalar_select %p37, 0, %s36
      %s39 = sadd.s32 1, %s30
      %s40 = scalar_select %p37, %s39, %s30
      %p41 = scmp.ge.s32.totalorder %s40, 8
      %s42 = scalar_select %p41, 0, %s40
      %s43 = smul.u32 %s30, 4
      %s44 = sadd.s32 %s43, %s31
      %s45 = sld [smem:[#allocation5 + %s44]]
      %s46 = sld [smem:[#allocation4 + %s31]]
      %s47 = sadd.s32 %s45, %s46
      %s48 = smul.u32 %s42, 4
      %s49 = sadd.s32 %s48, %s38
      %s50 = sld [smem:[#allocation5 + %s49]]
      %s51 = sld [smem:[#allocation4 + %s38]]
      %s52 = sadd.s32 %s50, %s51
      %s53 = ssub.s32 %s47, %s52
      %p54 = scmp.eq.s32.totalorder %s53, 0
      %s56 = sadd.s32 %s55, 1
      %s57 = scalar_select %p54, %s55, %s56
      %p60 = pneg %p54
      %p61 = scmp.eq.s32.totalorder %s23, 31
      %p62 = por %p60, %p61
      %p63 = scmp.ne.s32.totalorder %s55, %s58
      %p64 = scmp.eq.s32.totalorder %s23, 0
      %p65 = por %p63, %p64
      %p66 = scmp.ne.s32.totalorder %s55, %s58
      %p67 = scmp.eq.s32.totalorder %s28, 31
      %p68 = por %p66, %p67
      %p69 = scmp.ne.s32.totalorder %s58, %s59
      %p70 = scmp.eq.s32.totalorder %s28, 0
      %p71 = por %p69, %p70
      %p72 = scmp.ne.s32.totalorder %s58, %s59
      %p73 = scmp.eq.s32.totalorder %s29, 31
      %p74 = por %p72, %p73
      %p76 = scmp.ne.s32.totalorder %s59, %s75
      %p77 = scmp.eq.s32.totalorder %s29, 0
      %p78 = por %p76, %p77
      %s80 = sadd.s32 %s79, 1
      %p83 = scmp.eq.s32.totalorder %s23, 31
      %p84 = scmp.ne.s32.totalorder %s79, %s81
      %p85 = scmp.eq.s32.totalorder %s23, 0
      %p86 = por %p84, %p85
      %p87 = scmp.ne.s32.totalorder %s79, %s81
      %p88 = scmp.eq.s32.totalorder %s28, 31
      %p89 = por %p87, %p88
      %p90 = scmp.ne.s32.totalorder %s81, %s82
      %p91 = scmp.eq.s32.totalorder %s28, 0
      %p92 = por %p90, %p91
      %p93 = scmp.ne.s32.totalorder %s81, %s82
      %p94 = scmp.eq.s32.totalorder %s29, 31
      %p95 = por %p93, %p94
      %p97 = scmp.ne.s32.totalorder %s82, %s96
      %p98 = scmp.eq.s32.totalorder %s29, 0
      %p99 = por %p97, %p98
      %s100 = ssub.s32 %s30, %s42
      %p101 = scmp.eq.s32.totalorder %s100, 0
      %s103 = sadd.s32 %s102, 1
      %s104 = scalar_select %p101, %s102, %s103
      %p107 = pneg %p101
      %p108 = scmp.eq.s32.totalorder %s23, 31
      %p109 = por %p107, %p108
      %p110 = scmp.ne.s32.totalorder %s102, %s105
      %p111 = scmp.eq.s32.totalorder %s23, 0
      %p112 = por %p110, %p111
      %p113 = scmp.ne.s32.totalorder %s102, %s105
      %p114 = scmp.eq.s32.totalorder %s28, 31
      %p115 = por %p113, %p114
      %p116 = scmp.ne.s32.totalorder %s105, %s106
      %p117 = scmp.eq.s32.totalorder %s28, 0
      %p118 = por %p116, %p117
      %p119 = scmp.ne.s32.totalorder %s105, %s106
      %p120 = scmp.eq.s32.totalorder %s29, 31
      %p121 = por %p119, %p120
      %p123 = scmp.ne.s32.totalorder %s106, %s122
      %p124 = scmp.eq.s32.totalorder %s29, 0
      %p125 = por %p123, %p124
      %p126 = scmp.le.s32.totalorder 1, %s23
      %p127 = scmp.lt.s32.totalorder %s23, 33
      %p128 = pnand %p126, %p127
      %p129 = pneg %p128
      // Predicated region
      $region9: #{fm_forward.1} parent=5 // pred_check
        _
      $region10: #{fm_forward.1} parent=5 // pred_check_branch
        %131 = sbr.rel (%p128) target = $region12
      $region11: #{fm_forward.1} parent=5 // pred_region
        %s132 = ssub.s32 %s23, 1
        // Predicated region
        $region13: #{fm_forward.1} parent=11 // pred_check
          %p133 = pneg %p92
        $region14: #{fm_forward.1} parent=11 // pred_check_branch
          %135 = sbr.rel (%p133) target = $region16
        $region15: #{fm_forward.1} parent=11 // pred_region
          _
        $region16: #{fm_forward.1} parent=11 // pred_fallthru
          _
      $region12: #{fm_forward.1} parent=5 // pred_fallthru
        _
      %p136 = scmp.lt.s32.totalorder %s23, 32
      // Predicated region
      $region17: #{fm_forward.1} parent=5 // pred_check
        %p137 = pneg %p136
      $region18: #{fm_forward.1} parent=5 // pred_check_branch
        %139 = sbr.rel (%p137) target = $region20
      $region19: #{fm_forward.1} parent=5 // pred_region
        // Predicated region
        $region21: #{fm_forward.1} parent=19 // pred_check
          %p140 = pneg %p65
        $region22: #{fm_forward.1} parent=19 // pred_check_branch
          %142 = sbr.rel (%p140) target = $region24
        $region23: #{fm_forward.1} parent=19 // pred_region
          %s143 = sand.u32 %s55, 1
          %s144 = scalar_lea.sflag [#allocation7], %s143
          %s145 = sand.u32 %s55, 1
          %s146 = scalar_lea.vmem [#allocation6], %s145
          %s147 = smul.u32 %s30, 4
          %s148 = sadd.s32 %s147, %s31
          %s149 = sld [smem:[#allocation5 + %s148]]
          %s150 = sld [smem:[#allocation4 + %s31]]
          %s151 = sadd.s32 %s149, %s150
          %s153 = ssub.s32 16, 16
          %154 = vsyncadd %s144, %s153
          %s155 = smul.addr %s151, 16
          %s156 = scalar_lea.hbm %s2, %s155
          %s158 = sshll.u32 %s146, 4
          %s159 = int_to_ptr.vmem [resolvable:$true] %s158
          %161 = dma.hbm_to_vmem [thread:$0]  %s156, 16, %s159, %s144
        $region24: #{fm_forward.1} parent=19 // pred_fallthru
          _
      $region20: #{fm_forward.1} parent=5 // pred_fallthru
        _
      %p162 = scmp.le.s32.totalorder 1, %s23
      %p163 = scmp.lt.s32.totalorder %s23, 33
      %p164 = pnand %p162, %p163
      %p165 = pneg %p164
      // Predicated region
      $region25: #{fm_forward.1} parent=5 // pred_check
        _
      $region26: #{fm_forward.1} parent=5 // pred_check_branch
        %167 = sbr.rel (%p164) target = $region28
      $region27: #{fm_forward.1} parent=5 // pred_region
        %s168 = ssub.s32 %s23, 1
        %s169 = sand.u32 %s58, 1
        %s170 = scalar_lea.sflag [#allocation7], %s169
        %s171 = sand.u32 %s58, 1
        %s172 = scalar_lea.vmem [#allocation6], %s171
        // Predicated region
        $region29: #{fm_forward.1} parent=27 // pred_check
          %p173 = pneg %p71
        $region30: #{fm_forward.1} parent=27 // pred_check_branch
          %175 = sbr.rel (%p173) target = $region32
        $region31: #{fm_forward.1} parent=27 // pred_region
          %176 = dma.done %s170, 16
        $region32: #{fm_forward.1} parent=27 // pred_fallthru
          _
        %s177 = sand.u32 %s58, 1
        %s178 = scalar_lea.sflag [#allocation7], %s177
        %s179 = sand.u32 %s58, 1
        %s180 = scalar_lea.vmem [#allocation6], %s179
        %p181 = pneg %p71
        %p182 = pneg %p68
        %p183 = pneg %p92
        %p184 = pneg %p89
        %p185 = pneg %p118
        %p186 = pneg %p115
        %p187 = scmp.lt.s32.totalorder %s32, 7
        %s188 = scalar_select %p187, %s32, 7
        %s189 = scalar_lea.vmem %s4, %s188
        %s190 = smul.u32 %s32, 4
        %s191 = sadd.s32 %s190, %s33
        %s192 = sld [smem:[#allocation5 + %s191]]
        %s193 = sld [smem:[#allocation4 + %s33]]
        %s194 = sadd.s32 %s192, %s193
        %p195 = scmp.lt.s32.totalorder %s32, 7
        %s196 = scalar_select %p195, %s32, 7
        %s197 = scalar_lea.vmem %s4, %s196
        %p198 = scmp.eq.s32.totalorder %s33, 0
        // Predicated region
        $region33: #{fm_forward.1} parent=27 // pred_check
          %p199 = pneg %p198
        $region34: #{fm_forward.1} parent=27 // pred_check_branch
          %201 = sbr.rel (%p199) target = $region36
        $region35: #{fm_forward.1} parent=27 // pred_region
          %202 = vst [vmem:[#allocation2] sm:$0x1] 0.0
        $region36: #{fm_forward.1} parent=27 // pred_fallthru
          _
        %v203 = vld [vmem:[#allocation2] sm:$0x1]
        %v204 = vld [vmem:[%s172] sm:$0x1]
        %v205 = vadd.f32 %v203, %v204
        %206 = vst [vmem:[#allocation2] sm:$0x1] %v205
        %p207 = scmp.eq.s32.totalorder %s33, 3
        // Predicated region
        $region37: #{fm_forward.1} parent=27 // pred_check
          %p208 = pneg %p207
        $region38: #{fm_forward.1} parent=27 // pred_check_branch
          %210 = sbr.rel (%p208) target = $region40
        $region39: #{fm_forward.1} parent=27 // pred_region
          %v211 = vld [vmem:[#allocation2] sm:$0x1]
          %v212 = vlaneseq
          %v213 = vand.u32 %v212, 127
          %vm214 = vcmp.lt.s32.totalorder %v213, 32
          %v215 = vmul.f32 %v211, %v211
          %v216 = vsel %vm214, %v215, 0.0
          %vm217 = vcmask 1040384
          %v218 = vsel %vm217, %v216, 0.0
          %219 = vadd.xlane.f32.xlu0 %v218
          %v220 = vpop.xlane.xlu0 %219
          %v221 = vrot.slane %v220, 4
          %v222 = vadd.f32 %v220, %v221
          %v223 = vrot.slane %v222, 2
          %v224 = vadd.f32 %v222, %v223
          %v225 = vrot.slane %v224, 1
          %v226 = vadd.f32 %v224, %v225
          %s227 = vtos %v226
          %vm228 = vcmp.eq.s32.totalorder %v213, 33
          %v229 = vsel %vm228, %v211, 0.0
          %v230 = vsel %vm217, %v229, 0.0
          %231 = vadd.xlane.f32.xlu0 %v230
          %v232 = vpop.xlane.xlu0 %231
          %v233 = vrot.slane %v232, 4
          %v234 = vadd.f32 %v232, %v233
          %v235 = vrot.slane %v234, 2
          %v236 = vadd.f32 %v234, %v235
          %v237 = vrot.slane %v236, 1
          %v238 = vadd.f32 %v236, %v237
          %s239 = vtos %v238
          %s240 = ssub.f32 %s227, %s239
          %s241 = smul.f32 %s240, 0.5
          %v242 = vld [vmem:[%s3] sm:$0x1]
          %v243 = vadd.f32 %v211, %v242
          %v244 = vstv %s241
          %v245 = vadd.f32 %v243, %v244
          %vm246 = vcmp.ge.s32.totalorder %v213, 32
          %vm247 = vcmp.lt.s32.totalorder %v213, 33
          %vm248 = vmand %vm246, %vm247
          %v249 = vxor.u32 %v245, 2147483648
          %v250 = vmul.f32 %v249, 1.442695
          %v251 = vpow.pop %v250
          %v252 = vadd.f32 %v251, 1.0
          %v253 = vrcp.pop %v252
          %v254 = vmul.f32 1.0, %v253
          %v255 = vsel %vm248, %v254, 0.0
          %256 = vst [vmem:[%s197] sm:$0x1] %v255
        $region40: #{fm_forward.1} parent=27 // pred_fallthru
          _
        %p257 = scmp.lt.s32.totalorder %s32, 7
        %s258 = scalar_select %p257, %s32, 7
        %s259 = scalar_lea.vmem %s4, %s258
        // Predicated region
        $region41: #{fm_forward.1} parent=27 // pred_check
          %p260 = pneg %p115
        $region42: #{fm_forward.1} parent=27 // pred_check_branch
          %262 = sbr.rel (%p260) target = $region44
        $region43: #{fm_forward.1} parent=27 // pred_region
          _
        $region44: #{fm_forward.1} parent=27 // pred_fallthru
          _
      $region28: #{fm_forward.1} parent=5 // pred_fallthru
        _
      %p263 = scmp.le.s32.totalorder 2, %s23
      // Predicated region
      $region45: #{fm_forward.1} parent=5 // pred_check
        %p264 = pneg %p263
      $region46: #{fm_forward.1} parent=5 // pred_check_branch
        %266 = sbr.rel (%p264) target = $region48
      $region47: #{fm_forward.1} parent=5 // pred_region
        %s267 = ssub.s32 %s23, 2
        // Predicated region
        $region49: #{fm_forward.1} parent=47 // pred_check
          %p268 = pneg %p121
        $region50: #{fm_forward.1} parent=47 // pred_check_branch
          %270 = sbr.rel (%p268) target = $region52
        $region51: #{fm_forward.1} parent=47 // pred_region
          %p271 = scmp.lt.s32.totalorder %s34, 7
          %s272 = scalar_select %p271, %s34, 7
          %s273 = scalar_lea.vmem %s4, %s272
        $region52: #{fm_forward.1} parent=47 // pred_fallthru
          _
      $region48: #{fm_forward.1} parent=5 // pred_fallthru
        _
    $region6: #{fm_forward.1} parent=1 // loop_footer
      %s27 = sadd.s32 1, %s23
    $region7: #{fm_forward.1} parent=1 // loop_footer_branch
      %22 = sbr.rel target = $region3
    $region8: #{fm_forward.1} parent=1 // loop_exit
      _
    %274 = vsyncpa [#allocation7], 1
    %s275 = scalar_lea.sflag [#allocation7], 1
    %276 = vsyncpa %s275, 1

</llo_original>
